<compile_context>
chip_gen: v6e
topology: v6e:2x2x1
jax: 0.10.0
libtpu: 0.0.40
codegen_flags: <defaults>
</compile_context>

<pallas_src>
import functools

import jax
import jax.numpy as jnp
from jax.experimental import pallas as pl
from jax.experimental.pallas import tpu as pltpu


def _round_up(x, m):
    return ((x + m - 1) // m) * m


def _mlp3_kernel(x_ref, w1_ref, b1_ref, w2_ref, b2_ref, w3_ref, b3_ref, o_ref):
    """One batch tile: fused fc1+ReLU -> fc2+ReLU -> fc3 (dropout == identity in eval)."""
    cdt = w1_ref.dtype  # matmul operand dtype (f32 by default, bf16 if use_bf16=True)

    x = x_ref[...].astype(cdt)                                              # (TB, 63)

    # fc1 + ReLU (bias add / ReLU on the f32 accumulator; safe on all VPU generations).
    h1 = jnp.dot(x, w1_ref[...], preferred_element_type=jnp.float32)       # (TB, 128)
    h1 = jnp.maximum(h1 + b1_ref[...], 0.0)

    # fc2 + ReLU.
    h2 = jnp.dot(h1.astype(cdt), w2_ref[...],
                 preferred_element_type=jnp.float32)                       # (TB, 128)
    h2 = jnp.maximum(h2 + b2_ref[...], 0.0)

    # fc3: transpose-free per-row dot product.  w3 is stored as a (1, 128) row; broadcast
    # multiply (VPU) + lane reduce (XLU) -> (TB, 1).  No (TB, 128) vxpose, no narrow matmul.
    out = jnp.sum(h2 * w3_ref[...], axis=-1, keepdims=True)                # (TB, 1) f32
    o_ref[...] = (out + b3_ref[...]).astype(o_ref.dtype)


@functools.partial(jax.jit, static_argnames=("block_rows", "use_bf16"))
def mlp_3_layer_forward(x, w1, b1, w2, b2, w3, b3, *, block_rows=4096, use_bf16=False):
    """x: [B, 63] f32; weights stored [in_features, out_features]; returns [B, 1] f32."""
    B, in_dim = x.shape
    h1_dim = w1.shape[1]
    h2_dim = w2.shape[1]
    assert w3.shape[1] == 1, "kernel is specialized to output_size == 1 (as in forward())"

    # ---- batch tiling (rows -> sublanes) ----
    rows8 = _round_up(B, 8)
    tb = min(_round_up(block_rows, 8), rows8)
    if rows8 > 8:
        # Guarantee >= 2 grid steps so the "parallel" batch axis can shard across both
        # TensorCores on v7x (megacore); no effect on v5e/v6e beyond a slightly smaller tile.
        tb = min(tb, _round_up(pl.cdiv(rows8, 2), 8))
    b_pad = _round_up(B, tb)
    if b_pad != B:
        x = jnp.pad(x, ((0, b_pad - B), (0, 0)))
    num_tiles = b_pad // tb

    # ---- one-time weight prep: zero-pad lane dims to 128, optional bf16 operands ----
    cdt = jnp.bfloat16 if use_bf16 else jnp.float32
    h1p = _round_up(h1_dim, 128)   # 75  -> 128
    h2p = _round_up(h2_dim, 128)   # 125 -> 128
    w1p = jnp.pad(w1, ((0, 0), (0, h1p - h1_dim))).astype(cdt)                     # (63, 128)
    b1p = jnp.pad(b1.reshape(1, -1), ((0, 0), (0, h1p - h1_dim))).astype(jnp.float32)
    w2p = jnp.pad(w2, ((0, h1p - h1_dim), (0, h2p - h2_dim))).astype(cdt)          # (128, 128)
    b2p = jnp.pad(b2.reshape(1, -1), ((0, 0), (0, h2p - h2_dim))).astype(jnp.float32)
    w3p = jnp.pad(w3.T, ((0, 0), (0, h2p - h2_dim))).astype(jnp.float32)           # (1, 128) row
    b3p = b3.reshape(1, 1).astype(jnp.float32)                                     # (1, 1)

    const2d = lambda i: (0, 0)  # weights/biases: same block every step -> VMEM-resident

    # VMEM footprint: ~3-4 KB/row (double-buffered x tile + f32 h1/h2 intermediates + output)
    # plus ~100 KB resident weights.  Give explicit headroom (>= 32 MiB) so big tiles don't
    # hit the 16 MiB default scoped-VMEM limit on v5e.
    footprint = tb * 4 * 1024 + (4 << 20)
    vmem_bytes = int(min(max(footprint, 32 << 20), 100 << 20))

    out = pl.pallas_call(
        _mlp3_kernel,
        out_shape=jax.ShapeDtypeStruct((b_pad, 1), jnp.float32),
        grid=(num_tiles,),
        in_specs=[
            pl.BlockSpec((tb, in_dim), lambda i: (i, 0)),   # x tile (streamed)
            pl.BlockSpec((in_dim, h1p), const2d),           # w1
            pl.BlockSpec((1, h1p), const2d),                # b1
            pl.BlockSpec((h1p, h2p), const2d),              # w2
            pl.BlockSpec((1, h2p), const2d),                # b2
            pl.BlockSpec((1, h2p), const2d),                # w3 (stored as a row)
            pl.BlockSpec((1, 1), const2d),                  # b3
        ],
        out_specs=pl.BlockSpec((tb, 1), lambda i: (i, 0)),
        compiler_params=pltpu.CompilerParams(
            dimension_semantics=("parallel",),
            vmem_limit_bytes=vmem_bytes),
    )(x, w1p, b1p, w2p, b2p, w3p, b3p)

    return out[:B]


def init_params(key, input_size=63, hidden_dim1=75, hidden_dim2=125, output_size=1):
    """torch.nn.Linear-style init U(-1/sqrt(fan_in), 1/sqrt(fan_in)); weights are [in, out]."""
    ks = jax.random.split(key, 6)

    def linear(kw, kb, fan_in, fan_out):
        bound = 1.0 / jnp.sqrt(fan_in)
        w = jax.random.uniform(kw, (fan_in, fan_out), jnp.float32, -bound, bound)
        b = jax.random.uniform(kb, (1, fan_out), jnp.float32, -bound, bound)
        return w, b

    w1, b1 = linear(ks[0], ks[1], input_size, hidden_dim1)
    w2, b2 = linear(ks[2], ks[3], hidden_dim1, hidden_dim2)
    w3, b3 = linear(ks[4], ks[5], hidden_dim2, output_size)
    return w1, b1, w2, b2, w3, b3


def _ref_f32(x, params):
    """Full-precision PyTorch-equivalent forward (dropout = identity in eval)."""
    w1, b1, w2, b2, w3, b3 = params
    h1 = jnp.maximum(x @ w1 + b1, 0.0)
    h2 = jnp.maximum(h1 @ w2 + b2, 0.0)
    return h2 @ w3 + b3


if __name__ == "__main__":
    key = jax.random.PRNGKey(0)
    k_params, k1, k2, k3 = jax.random.split(key, 4)

    params = init_params(k_params)

    xs = [
        jax.random.normal(k1, (8, 63), jnp.float32),     # single tile
        jax.random.normal(k2, (5, 63), jnp.float32),     # ragged (< one sublane group)
        jax.random.normal(k3, (300, 63), jnp.float32),   # multi-tile with ragged tail
    ]

    # Default (f32) path: should track the full-precision reference closely.
    for x in xs:
        out = jax.block_until_ready(
            mlp_3_layer_forward(x, *params, block_rows=128))
        ref = _ref_f32(x, params)
        assert out.shape == (x.shape[0], 1)
        assert jnp.allclose(out, ref, atol=2e-2, rtol=2e-2), "f32 path mismatch"

    # Opt-in bf16 fast path (halves the dominant HBM stream); looser tolerance.
    out_bf16 = jax.block_until_ready(
        mlp_3_layer_forward(xs[2], *params, block_rows=128, use_bf16=True))
    assert out_bf16.shape == (xs[2].shape[0], 1)
    assert jnp.allclose(out_bf16, _ref_f32(xs[2], params), atol=5e-2, rtol=5e-2), \
        "bf16 path mismatch"

    print("KERNEL_OK")
</pallas_src>

<mosaic_0001>
module attributes {stable_mosaic.version = 11 : i64} {
  func.func @_mlp3_kernel(%arg0: i32, %arg1: memref<8x63xf32, #tpu.memory_space<vmem>>, %arg2: memref<63x128xf32, #tpu.memory_space<vmem>>, %arg3: memref<1x128xf32, #tpu.memory_space<vmem>>, %arg4: memref<128x128xf32, #tpu.memory_space<vmem>>, %arg5: memref<1x128xf32, #tpu.memory_space<vmem>>, %arg6: memref<1x128xf32, #tpu.memory_space<vmem>>, %arg7: memref<1x1xf32, #tpu.memory_space<vmem>>, %arg8: memref<8x1xf32, #tpu.memory_space<vmem>>) attributes {dimension_semantics = [#tpu.dimension_semantics<parallel>], iteration_bounds = array<i64: 1>, scalar_prefetch = 0 : i64, scratch_operands = 0 : i64, tpu.core_type = #tpu.core_type<tc>, window_params = [{transform_indices = @transform_0, window_bounds = array<i64: 8, 63>}, {pipeline_mode = #tpu.pipeline_mode<synchronous>, transform_indices = @transform_1, window_bounds = array<i64: 63, 128>}, {pipeline_mode = #tpu.pipeline_mode<synchronous>, transform_indices = @transform_2, window_bounds = array<i64: 1, 128>}, {pipeline_mode = #tpu.pipeline_mode<synchronous>, transform_indices = @transform_3, window_bounds = array<i64: 128, 128>}, {pipeline_mode = #tpu.pipeline_mode<synchronous>, transform_indices = @transform_4, window_bounds = array<i64: 1, 128>}, {pipeline_mode = #tpu.pipeline_mode<synchronous>, transform_indices = @transform_5, window_bounds = array<i64: 1, 128>}, {pipeline_mode = #tpu.pipeline_mode<synchronous>, transform_indices = @transform_6, window_bounds = array<i64: 1, 1>}, {transform_indices = @transform_7, window_bounds = array<i64: 8, 1>}]} {
    %c0 = arith.constant 0 : index
    %c0_0 = arith.constant 0 : index
    %0 = vector.load %arg1[%c0, %c0_0] : memref<8x63xf32, #tpu.memory_space<vmem>>, vector<8x63xf32>
    %c0_1 = arith.constant 0 : index
    %c0_2 = arith.constant 0 : index
    %1 = vector.load %arg2[%c0_1, %c0_2] : memref<63x128xf32, #tpu.memory_space<vmem>>, vector<63x128xf32>
    %cst = arith.constant dense<0.000000e+00> : vector<8x128xf32>
    %2 = tpu.matmul %0, %1, %cst {dimension_numbers = #tpu.dot_dimension_numbers<[1], [0], [0], [1], [0, 0, 1, 1], [], []>} : vector<8x63xf32>, vector<63x128xf32>, vector<8x128xf32> -> vector<8x128xf32>
    %c0_3 = arith.constant 0 : index
    %c0_4 = arith.constant 0 : index
    %3 = vector.load %arg3[%c0_3, %c0_4] : memref<1x128xf32, #tpu.memory_space<vmem>>, vector<1x128xf32>
    %4 = vector.broadcast %3 : vector<1x128xf32> to vector<8x128xf32>
    %5 = arith.addf %2, %4 : vector<8x128xf32>
    %cst_5 = arith.constant 0.000000e+00 : f32
    %6 = vector.broadcast %cst_5 : f32 to vector<8x128xf32>
    %7 = arith.maximumf %5, %6 : vector<8x128xf32>
    %c0_6 = arith.constant 0 : index
    %c0_7 = arith.constant 0 : index
    %8 = vector.load %arg4[%c0_6, %c0_7] : memref<128x128xf32, #tpu.memory_space<vmem>>, vector<128x128xf32>
    %cst_8 = arith.constant dense<0.000000e+00> : vector<8x128xf32>
    %9 = tpu.matmul %7, %8, %cst_8 {dimension_numbers = #tpu.dot_dimension_numbers<[1], [0], [0], [1], [0, 0, 1, 1], [], []>} : vector<8x128xf32>, vector<128x128xf32>, vector<8x128xf32> -> vector<8x128xf32>
    %c0_9 = arith.constant 0 : index
    %c0_10 = arith.constant 0 : index
    %10 = vector.load %arg5[%c0_9, %c0_10] : memref<1x128xf32, #tpu.memory_space<vmem>>, vector<1x128xf32>
    %11 = vector.broadcast %10 : vector<1x128xf32> to vector<8x128xf32>
    %12 = arith.addf %9, %11 : vector<8x128xf32>
    %cst_11 = arith.constant 0.000000e+00 : f32
    %13 = vector.broadcast %cst_11 : f32 to vector<8x128xf32>
    %14 = arith.maximumf %12, %13 : vector<8x128xf32>
    %c0_12 = arith.constant 0 : index
    %c0_13 = arith.constant 0 : index
    %15 = vector.load %arg6[%c0_12, %c0_13] : memref<1x128xf32, #tpu.memory_space<vmem>>, vector<1x128xf32>
    %16 = vector.broadcast %15 : vector<1x128xf32> to vector<8x128xf32>
    %17 = arith.mulf %14, %16 : vector<8x128xf32>
    %cst_14 = arith.constant dense<0.000000e+00> : vector<8xf32>
    %18 = vector.multi_reduction <add>, %17, %cst_14 [1] : vector<8x128xf32> to vector<8xf32>
    %19 = vector.shape_cast %18 : vector<8xf32> to vector<8x1xf32>
    %c0_15 = arith.constant 0 : index
    %c0_16 = arith.constant 0 : index
    %20 = vector.load %arg7[%c0_15, %c0_16] : memref<1x1xf32, #tpu.memory_space<vmem>>, vector<1x1xf32>
    %21 = vector.broadcast %20 : vector<1x1xf32> to vector<8x1xf32>
    %22 = arith.addf %19, %21 : vector<8x1xf32>
    %c0_17 = arith.constant 0 : index
    %c0_18 = arith.constant 0 : index
    %23 = vector.load %arg8[%c0_17, %c0_18] : memref<8x1xf32, #tpu.memory_space<vmem>>, vector<8x1xf32>
    tpu.vector_store %arg8[%c0_17, %c0_18], %22 {strides = array<i32>} : memref<8x1xf32, #tpu.memory_space<vmem>>, vector<8x1xf32>,
    return
  }
  func.func @transform_0(%arg0: i32) -> (i32, i32) {
    %c0_i32 = arith.constant 0 : i32
    %c0_i32_0 = arith.constant 0 : i32
    return %arg0, %c0_i32 : i32, i32
  }
  func.func @transform_1(%arg0: i32) -> (i32, i32) {
    %c0_i32 = arith.constant 0 : i32
    %c0_i32_0 = arith.constant 0 : i32
    %c0_i32_1 = arith.constant 0 : i32
    return %c0_i32, %c0_i32_0 : i32, i32
  }
  func.func @transform_2(%arg0: i32) -> (i32, i32) {
    %c0_i32 = arith.constant 0 : i32
    %c0_i32_0 = arith.constant 0 : i32
    %c0_i32_1 = arith.constant 0 : i32
    return %c0_i32, %c0_i32_0 : i32, i32
  }
  func.func @transform_3(%arg0: i32) -> (i32, i32) {
    %c0_i32 = arith.constant 0 : i32
    %c0_i32_0 = arith.constant 0 : i32
    %c0_i32_1 = arith.constant 0 : i32
    return %c0_i32, %c0_i32_0 : i32, i32
  }
  func.func @transform_4(%arg0: i32) -> (i32, i32) {
    %c0_i32 = arith.constant 0 : i32
    %c0_i32_0 = arith.constant 0 : i32
    %c0_i32_1 = arith.constant 0 : i32
    return %c0_i32, %c0_i32_0 : i32, i32
  }
  func.func @transform_5(%arg0: i32) -> (i32, i32) {
    %c0_i32 = arith.constant 0 : i32
    %c0_i32_0 = arith.constant 0 : i32
    %c0_i32_1 = arith.constant 0 : i32
    return %c0_i32, %c0_i32_0 : i32, i32
  }
  func.func @transform_6(%arg0: i32) -> (i32, i32) {
    %c0_i32 = arith.constant 0 : i32
    %c0_i32_0 = arith.constant 0 : i32
    %c0_i32_1 = arith.constant 0 : i32
    return %c0_i32, %c0_i32_0 : i32, i32
  }
  func.func @transform_7(%arg0: i32) -> (i32, i32) {
    %c0_i32 = arith.constant 0 : i32
    %c0_i32_0 = arith.constant 0 : i32
    return %arg0, %c0_i32 : i32, i32
  }
}

</mosaic_0001>

<llo_original>
// kernel: mlp_3_layer_forward.1
$region0: #{mlp_3_layer_forward.1}
  #allocation0 [shape = 'u32[]', space=smem, size = 0x4, offset = 0x4, fixed_abs, tag = 'smem constant byte address 0x4 - core index']
  #allocation1 [shape = 'u32[144,128]{1,0:T(1,128)}', space=vmem, size = 0x12000, scoped, tag = 'internal scratch']
  #allocation2 [shape = 'f32[1,1]{1,0:T(1,128)S(1)}', space=vmem, size = 0x200, scoped, tag = 'scoped memory for mlp_3_layer_forward.1']
  %s0 = inlined_call_operand.vmem [shape: f32[8,63], index: 0, kind: input, shape index: {}]
  %s1 = inlined_call_operand.vmem [shape: f32[63,128], index: 1, kind: input, shape index: {}]
  %s2 = inlined_call_operand.vmem [shape: f32[1,128], index: 2, kind: input, shape index: {}]
  %s3 = inlined_call_operand.vmem [shape: f32[128,128], index: 3, kind: input, shape index: {}]
  %s4 = inlined_call_operand.vmem [shape: f32[1,128], index: 4, kind: input, shape index: {}]
  %s5 = inlined_call_operand.vmem [shape: f32[1,128], index: 5, kind: input, shape index: {}]
  %s6 = inlined_call_operand.<no memory space> [shape: f32[1,1], index: 6, kind: input, shape index: {}]
  %s7 = inlined_call_operand.vmem [shape: f32[8,1], index: 7, kind: output, shape index: {}]
  %s8 = sld [smem:[#allocation0]]
  $region38: #{mlp_3_layer_forward.1} parent=0
    _
  %s10 = ssub.s32 1, %s8
  %s11 = scalar_select 0, %s10, %s8
  %v12 = vstv %s6
  %13 = vst [vmem:[#allocation2] sm:$0x1] %v12
  // Predicated region
  $region2: #{mlp_3_layer_forward.1} parent=0 // pred_check
    _
  $region3: #{mlp_3_layer_forward.1} parent=0 // pred_check_branch
    %15 = sbr.rel (0) target = $region5
  $region4: #{mlp_3_layer_forward.1} parent=0 // pred_region
    _
  $region5: #{mlp_3_layer_forward.1} parent=0 // pred_fallthru
    _
  // Predicated region
  $region6: #{mlp_3_layer_forward.1} parent=0 // pred_check
    _
  $region7: #{mlp_3_layer_forward.1} parent=0 // pred_check_branch
    %17 = sbr.rel (0) target = $region9
  $region8: #{mlp_3_layer_forward.1} parent=0 // pred_region
    _
  $region9: #{mlp_3_layer_forward.1} parent=0 // pred_fallthru
    _
  // Predicated region
  $region10: #{mlp_3_layer_forward.1} parent=0 // pred_check
    _
  $region11: #{mlp_3_layer_forward.1} parent=0 // pred_check_branch
    %19 = sbr.rel (0) target = $region13
  $region12: #{mlp_3_layer_forward.1} parent=0 // pred_region
    _
  $region13: #{mlp_3_layer_forward.1} parent=0 // pred_fallthru
    _
  // Predicated region
  $region14: #{mlp_3_layer_forward.1} parent=0 // pred_check
    _
  $region15: #{mlp_3_layer_forward.1} parent=0 // pred_check_branch
    %21 = sbr.rel (0) target = $region17
  $region16: #{mlp_3_layer_forward.1} parent=0 // pred_region
    _
  $region17: #{mlp_3_layer_forward.1} parent=0 // pred_fallthru
    _
  // Predicated region
  $region18: #{mlp_3_layer_forward.1} parent=0 // pred_check
    _
  $region19: #{mlp_3_layer_forward.1} parent=0 // pred_check_branch
    %23 = sbr.rel (0) target = $region21
  $region20: #{mlp_3_layer_forward.1} parent=0 // pred_region
    _
  $region21: #{mlp_3_layer_forward.1} parent=0 // pred_fallthru
    _
  // Predicated region
  $region22: #{mlp_3_layer_forward.1} parent=0 // pred_check
    _
  $region23: #{mlp_3_layer_forward.1} parent=0 // pred_check_branch
    %25 = sbr.rel (0) target = $region25
  $region24: #{mlp_3_layer_forward.1} parent=0 // pred_region
    _
  $region25: #{mlp_3_layer_forward.1} parent=0 // pred_fallthru
    _
  // Predicated region
  $region26: #{mlp_3_layer_forward.1} parent=0 // pred_check
    _
  $region27: #{mlp_3_layer_forward.1} parent=0 // pred_check_branch
    %27 = sbr.rel (0) target = $region29
  $region28: #{mlp_3_layer_forward.1} parent=0 // pred_region
    _
  $region29: #{mlp_3_layer_forward.1} parent=0 // pred_fallthru
    _
  %v28 = vld [vmem:[%s0] sm:$0xff]
  %v29 = vld [vmem:[%s1] sm:$0xff]
  %v30 = vld [vmem:[%s1 + $0x8] sm:$0xff]
  %v31 = vld [vmem:[%s1 + $0x10] sm:$0xff]
  %v32 = vld [vmem:[%s1 + $0x18] sm:$0xff]
  %v33 = vld [vmem:[%s1 + $0x20] sm:$0xff]
  %v34 = vld [vmem:[%s1 + $0x28] sm:$0xff]
  %v35 = vld [vmem:[%s1 + $0x30] sm:$0xff]
  %v36 = vld [vmem:[%s1 + $0x38] sm:$0x7f]
  %v37 = vld [vmem:[%s2] sm:$0x1]
  %v39 = vlaneseq
  %v40 = vshrl.u32 %v39, 7
  %v41 = vsub.s32 0, %v40
  %v42 = vrot.slane %v37, %v41
  %vm44 = vcmask 515072
  %v46 = vsel %vm44, %v28, 0
  %vm48 = vcmask 1046528
  %v50 = vsel %vm48, %v36, 0
  %52 = vmatprep.subr.mxu0 0.0
  %53 = vmatpush1.msra.mxu0 0.0
  %54 = vmatprep.subr.mxu0 0.0
  %55 = vmatpush1.msra.mxu0 0.0
  %56 = vmatprep.subr.mxu0 0.0
  %57 = vmatpush1.msra.mxu0 0.0
  %58 = vmatprep.subr.mxu0 0.0
  %59 = vmatpush1.msra.mxu0 0.0
  %60 = vmatprep.subr.mxu0 0.0
  %61 = vmatpush1.msra.mxu0 0.0
  %62 = vmatprep.subr.mxu0 0.0
  %63 = vmatpush1.msra.mxu0 0.0
  %64 = vmatprep.subr.mxu0 0.0
  %65 = vmatpush1.msra.mxu0 0.0
  %66 = vmatprep.subr.mxu0 0.0
  %67 = vmatpush1.msra.mxu0 0.0
  %68 = vmatprep.subr.mxu0 0.0
  %69 = vmatpush1.msra.mxu0 %v50
  %70 = vmatprep.subr.mxu0 0.0
  %71 = vmatpush1.msra.mxu0 %v35
  %72 = vmatprep.subr.mxu0 0.0
  %73 = vmatpush1.msra.mxu0 %v34
  %74 = vmatprep.subr.mxu0 0.0
  %75 = vmatpush1.msra.mxu0 %v33
  %76 = vmatprep.subr.mxu0 0.0
  %77 = vmatpush1.msra.mxu0 %v32
  %78 = vmatprep.subr.mxu0 0.0
  %79 = vmatpush1.msra.mxu0 %v31
  %80 = vmatprep.subr.mxu0 0.0
  %81 = vmatpush1.msra.mxu0 %v30
  %82 = vmatprep.subr.mxu0 0.0
  %83 = vmatpush1.msra.mxu0 %v29
  %84 = vmatprep.subr.mxu0 0.0
  %85 = vmatpush2.msra.mxu0 0.0
  %86 = vmatprep.subr.mxu0 0.0
  %87 = vmatpush2.msra.mxu0 0.0
  %88 = vmatprep.subr.mxu0 0.0
  %89 = vmatpush2.msra.mxu0 0.0
  %90 = vmatprep.subr.mxu0 0.0
  %91 = vmatpush2.msra.mxu0 0.0
  %92 = vmatprep.subr.mxu0 0.0
  %93 = vmatpush2.msra.mxu0 0.0
  %94 = vmatprep.subr.mxu0 0.0
  %95 = vmatpush2.msra.mxu0 0.0
  %96 = vmatprep.subr.mxu0 0.0
  %97 = vmatpush2.msra.mxu0 0.0
  %98 = vmatprep.subr.mxu0 0.0
  %99 = vmatpush2.msra.mxu0 0.0
  %100 = vmatprep.subr.mxu0 0.0
  %101 = vmatpush2.msra.mxu0 0.0
  %102 = vmatprep.subr.mxu0 0.0
  %103 = vmatpush2.msra.mxu0 0.0
  %104 = vmatprep.subr.mxu0 0.0
  %105 = vmatpush2.msra.mxu0 0.0
  %106 = vmatprep.subr.mxu0 0.0
  %107 = vmatpush2.msra.mxu0 0.0
  %108 = vmatprep.subr.mxu0 0.0
  %109 = vmatpush2.msra.mxu0 0.0
  %110 = vmatprep.subr.mxu0 0.0
  %111 = vmatpush2.msra.mxu0 0.0
  %112 = vmatprep.subr.mxu0 0.0
  %113 = vmatpush2.msra.mxu0 0.0
  %114 = vmatprep.subr.mxu0 0.0
  %115 = vmatpush2.msra.mxu0 0.0
  %116 = vmatprep.mubr.f32.mxu0 0.0
  %117 = vmatmul.mubr.f32.gmra.mxu0 %v46
  %v118 = vpop.f32.mrf.mxu0
  %v119 = vadd.f32 %v42, %v118
  %v120 = vpop.f32.mrf.mxu0
  %121 = vdwg.mxu0
  %v122 = vmax.f32 %v119, 0.0
  %v123 = vld [vmem:[%s3] sm:$0xff]
  %v124 = vld [vmem:[%s3 + $0x8] sm:$0xff]
  %v125 = vld [vmem:[%s3 + $0x10] sm:$0xff]
  %v126 = vld [vmem:[%s3 + $0x18] sm:$0xff]
  %v127 = vld [vmem:[%s3 + $0x20] sm:$0xff]
  %v128 = vld [vmem:[%s3 + $0x28] sm:$0xff]
  %v129 = vld [vmem:[%s3 + $0x30] sm:$0xff]
  %v130 = vld [vmem:[%s3 + $0x38] sm:$0xff]
  %v131 = vld [vmem:[%s3 + $0x40] sm:$0xff]
  %v132 = vld [vmem:[%s3 + $0x48] sm:$0xff]
  %v133 = vld [vmem:[%s3 + $0x50] sm:$0xff]
  %v134 = vld [vmem:[%s3 + $0x58] sm:$0xff]
  %v135 = vld [vmem:[%s3 + $0x60] sm:$0xff]
  %v136 = vld [vmem:[%s3 + $0x68] sm:$0xff]
  %v137 = vld [vmem:[%s3 + $0x70] sm:$0xff]
  %v138 = vld [vmem:[%s3 + $0x78] sm:$0xff]
  %v139 = vld [vmem:[%s4] sm:$0x1]
  %v141 = vlaneseq
  %v142 = vshrl.u32 %v141, 7
  %v143 = vsub.s32 0, %v142
  %v144 = vrot.slane %v139, %v143
  %146 = vmatprep.subr.mxu0 0.0
  %147 = vmatpush1.msra.mxu0 %v138
  %148 = vmatprep.subr.mxu0 0.0
  %149 = vmatpush1.msra.mxu0 %v137
  %150 = vmatprep.subr.mxu0 0.0
  %151 = vmatpush1.msra.mxu0 %v136
  %152 = vmatprep.subr.mxu0 0.0
  %153 = vmatpush1.msra.mxu0 %v135
  %154 = vmatprep.subr.mxu0 0.0
  %155 = vmatpush1.msra.mxu0 %v134
  %156 = vmatprep.subr.mxu0 0.0
  %157 = vmatpush1.msra.mxu0 %v133
  %158 = vmatprep.subr.mxu0 0.0
  %159 = vmatpush1.msra.mxu0 %v132
  %160 = vmatprep.subr.mxu0 0.0
  %161 = vmatpush1.msra.mxu0 %v131
  %162 = vmatprep.subr.mxu0 0.0
  %163 = vmatpush1.msra.mxu0 %v130
  %164 = vmatprep.subr.mxu0 0.0
  %165 = vmatpush1.msra.mxu0 %v129
  %166 = vmatprep.subr.mxu0 0.0
  %167 = vmatpush1.msra.mxu0 %v128
  %168 = vmatprep.subr.mxu0 0.0
  %169 = vmatpush1.msra.mxu0 %v127
  %170 = vmatprep.subr.mxu0 0.0
  %171 = vmatpush1.msra.mxu0 %v126
  %172 = vmatprep.subr.mxu0 0.0
  %173 = vmatpush1.msra.mxu0 %v125
  %174 = vmatprep.subr.mxu0 0.0
  %175 = vmatpush1.msra.mxu0 %v124
  %176 = vmatprep.subr.mxu0 0.0
  %177 = vmatpush1.msra.mxu0 %v123
  %178 = vmatprep.subr.mxu0 0.0
  %179 = vmatpush2.msra.mxu0 0.0
  %180 = vmatprep.subr.mxu0 0.0
  %181 = vmatpush2.msra.mxu0 0.0
  %182 = vmatprep.subr.mxu0 0.0
  %183 = vmatpush2.msra.mxu0 0.0
  %184 = vmatprep.subr.mxu0 0.0
  %185 = vmatpush2.msra.mxu0 0.0
  %186 = vmatprep.subr.mxu0 0.0
  %187 = vmatpush2.msra.mxu0 0.0
  %188 = vmatprep.subr.mxu0 0.0
  %189 = vmatpush2.msra.mxu0 0.0
  %190 = vmatprep.subr.mxu0 0.0
  %191 = vmatpush2.msra.mxu0 0.0
  %192 = vmatprep.subr.mxu0 0.0
  %193 = vmatpush2.msra.mxu0 0.0
  %194 = vmatprep.subr.mxu0 0.0
  %195 = vmatpush2.msra.mxu0 0.0
  %196 = vmatprep.subr.mxu0 0.0
  %197 = vmatpush2.msra.mxu0 0.0
  %198 = vmatprep.subr.mxu0 0.0
  %199 = vmatpush2.msra.mxu0 0.0
  %200 = vmatprep.subr.mxu0 0.0
  %201 = vmatpush2.msra.mxu0 0.0
  %202 = vmatprep.subr.mxu0 0.0
  %203 = vmatpush2.msra.mxu0 0.0
  %204 = vmatprep.subr.mxu0 0.0
  %205 = vmatpush2.msra.mxu0 0.0
  %206 = vmatprep.subr.mxu0 0.0
  %207 = vmatpush2.msra.mxu0 0.0
  %208 = vmatprep.subr.mxu0 0.0
  %209 = vmatpush2.msra.mxu0 0.0
  %210 = vmatprep.mubr.f32.mxu0 0.0
  %211 = vmatmul.mubr.f32.gmra.mxu0 %v122
  %v212 = vpop.f32.mrf.mxu0
  %v213 = vadd.f32 %v144, %v212
  %v214 = vpop.f32.mrf.mxu0
  %215 = vdwg.mxu0
  %v216 = vmax.f32 %v213, 0.0
  %v217 = vld [vmem:[%s5] sm:$0x1]
  %v219 = vlaneseq
  %v220 = vshrl.u32 %v219, 7
  %v221 = vsub.s32 0, %v220
  %v222 = vrot.slane %v217, %v221
  %v224 = vmul.f32 %v216, %v222
  %225 = vadd.xlane.f32.xlu0 %v224
  %v226 = vpop.xlane.xlu0 %225
  %v227 = vld [vmem:[#allocation2] sm:$0x1]
  %v229 = vlaneseq
  %v230 = vshrl.u32 %v229, 7
  %v231 = vsub.s32 0, %v230
  %v232 = vrot.slane %v227, %v231
  %v234 = vadd.f32 %v226, %v232
  %vm235 = vcmask 7168
  %236 = vst.msk [vmem:[%s7] sm:$0xff] %vm235, %v234
  // Predicated region
  $region30: #{mlp_3_layer_forward.1} parent=0 // pred_check
    _
  $region31: #{mlp_3_layer_forward.1} parent=0 // pred_check_branch
    %238 = sbr.rel (0) target = $region33
  $region32: #{mlp_3_layer_forward.1} parent=0 // pred_region
    _
  $region33: #{mlp_3_layer_forward.1} parent=0 // pred_fallthru
    _
  // Predicated region
  $region34: #{mlp_3_layer_forward.1} parent=0 // pred_check
    _
  $region35: #{mlp_3_layer_forward.1} parent=0 // pred_check_branch
    %240 = sbr.rel (0) target = $region37
  $region36: #{mlp_3_layer_forward.1} parent=0 // pred_region
    _
  $region37: #{mlp_3_layer_forward.1} parent=0 // pred_fallthru
    _

</llo_original>
